<compile_context>
chip_gen: v7x
topology: tpu7x:2x2x1
jax: 0.10.0
libtpu: 0.0.40
codegen_flags: <defaults>
</compile_context>

<pallas_src>
import functools

import jax
import jax.numpy as jnp
from jax.experimental import pallas as pl
from jax.experimental.pallas import tpu as pltpu


def _bn_train_kernel(x_ref, gamma_ref, beta_ref, o_ref, *, eps, inv_count):
    # x_ref: (N, TC, HW) block.  Batch statistics per channel = reduce over
    # axes (0, 2).  One-pass sums in f32, then fused scale/shift so the
    # per-element work is a single mul + add.
    x = x_ref[...].astype(jnp.float32)
    s1 = jnp.sum(x, axis=(0, 2), keepdims=True)           # (1, TC, 1)
    s2 = jnp.sum(x * x, axis=(0, 2), keepdims=True)       # (1, TC, 1)
    mean = s1 * inv_count
    var = s2 * inv_count - mean * mean                     # biased variance
    inv = jax.lax.rsqrt(var + eps)                         # (1, TC, 1)
    gamma = gamma_ref[...].astype(jnp.float32)             # (1, TC, 1)
    beta = beta_ref[...].astype(jnp.float32)               # (1, TC, 1)
    scale = inv * gamma                                    # (1, TC, 1)
    shift = beta - mean * scale                            # (1, TC, 1)
    o_ref[...] = (x * scale + shift).astype(o_ref.dtype)


def _pick_channel_tile(C, per_channel_block_bytes, budget_bytes):
    """Largest channel tile whose 2x double-buffered in+out blocks fit budget."""
    max_tc = max(1, budget_bytes // (4 * per_channel_block_bytes))
    if C <= max_tc:
        return C
    tc = min((max_tc // 8) * 8, (C // 8) * 8)
    while tc >= 8:
        if C % tc == 0:
            return tc
        tc -= 8
    return C  # fallback: whole channel axis in one block


def batchnorm2d_train_pallas(x_nchw, gamma, beta, eps=1e-5, channel_tile=None):
    """BatchNorm2d forward in train mode (batch statistics), NCHW in/out.

    Input/output dtype is preserved (e.g. bf16 activations stay bf16 at the
    HBM boundary); statistics are accumulated in f32 inside the kernel.
    """
    N, C, H, W = x_nchw.shape
    HW = H * W
    x3d = x_nchw.reshape(N, C, HW)          # zero-copy view of contiguous NCHW
    g3d = gamma.reshape(1, C, 1)
    b3d = beta.reshape(1, C, 1)

    itemsize = jnp.dtype(x3d.dtype).itemsize
    per_channel_block_bytes = N * HW * itemsize
    # Budget ~40 MiB for (2 double-buffered input + 2 output) blocks: safe on
    # v7x (64 MiB VMEM) and comfortably within v5e/v6e physical VMEM.
    if channel_tile is None:
        TC = _pick_channel_tile(C, per_channel_block_bytes, 40 << 20)
    else:
        TC = channel_tile
    assert C % TC == 0, "channel tile must divide C"
    grid = (C // TC,)

    block_bytes = N * TC * HW * itemsize
    vmem_limit = int(min(max(4 * block_bytes + (4 << 20), 16 << 20), 48 << 20))

    kernel = functools.partial(
        _bn_train_kernel, eps=float(eps), inv_count=1.0 / float(N * HW))

    out3d = pl.pallas_call(
        kernel,
        out_shape=jax.ShapeDtypeStruct((N, C, HW), x3d.dtype),
        grid=grid,
        in_specs=[
            pl.BlockSpec((N, TC, HW), lambda c: (0, c, 0)),
            pl.BlockSpec((1, TC, 1), lambda c: (0, c, 0)),
            pl.BlockSpec((1, TC, 1), lambda c: (0, c, 0)),
        ],
        out_specs=pl.BlockSpec((N, TC, HW), lambda c: (0, c, 0)),
        compiler_params=pltpu.CompilerParams(
            dimension_semantics=("parallel",),
            vmem_limit_bytes=vmem_limit,
        ),
    )(x3d, g3d, b3d)

    return out3d.reshape(N, C, H, W)


class NormPallas:
    """Mirror of the PyTorch Norm module: model = BatchNorm2d layers forced
    into train mode; forward(x, target) ignores target and returns model(x)."""

    def __init__(self, num_channels, eps=1e-5, reset_stats=False, no_stats=False):
        self.eps = eps
        self.reset_stats = reset_stats
        self.no_stats = no_stats
        # Deterministic affine parameters (nn.BatchNorm2d default init is
        # gamma=1, beta=0; perturb slightly so the affine path is exercised).
        c = jnp.arange(num_channels, dtype=jnp.float32)
        self.gamma = 1.0 + 0.1 * c
        self.beta = 0.05 * c
        # TODO(synk): running_mean/running_var momentum updates (train-mode
        # side effect) are not implemented; they do not affect the returned
        # output when BN is in train mode.

    def forward(self, x, target):
        del target  # unused, as in the reference module
        return batchnorm2d_train_pallas(x, self.gamma, self.beta, eps=self.eps)


def _reference_bn_train(x_nchw, gamma, beta, eps):
    x = x_nchw.astype(jnp.float32)
    mean = jnp.mean(x, axis=(0, 2, 3), keepdims=True)
    var = jnp.mean((x - mean) ** 2, axis=(0, 2, 3), keepdims=True)
    g = gamma.reshape(1, -1, 1, 1)
    b = beta.reshape(1, -1, 1, 1)
    y = (x - mean) * jax.lax.rsqrt(var + eps) * g + b
    return y.astype(x_nchw.dtype)


if __name__ == "__main__":
    key = jax.random.PRNGKey(0)

    # Case 1: shapes implied by the module (small, single grid step).
    N, C, H, W = 2, 4, 16, 16
    x = jax.random.normal(key, (N, C, H, W), dtype=jnp.float32) * 2.0 + 0.5
    target = jnp.zeros((N,), dtype=jnp.int32)  # ignored, as in PyTorch module

    norm = NormPallas(num_channels=C, eps=1e-5)
    out = norm.forward(x, target)
    out = jax.block_until_ready(out)

    ref = _reference_bn_train(x, norm.gamma, norm.beta, eps=1e-5)
    assert out.shape == (N, C, H, W)
    assert jnp.allclose(out, ref, atol=1e-4, rtol=1e-4)

    # Case 2: exercise the channel-tiled grid (>1 grid step) explicitly.
    key2 = jax.random.PRNGKey(1)
    N2, C2, H2, W2 = 2, 16, 8, 8
    x2 = jax.random.normal(key2, (N2, C2, H2, W2), dtype=jnp.float32) - 1.0
    c2 = jnp.arange(C2, dtype=jnp.float32)
    g2 = 1.0 + 0.1 * c2
    b2 = 0.05 * c2
    out2 = batchnorm2d_train_pallas(x2, g2, b2, eps=1e-5, channel_tile=8)
    out2 = jax.block_until_ready(out2)
    ref2 = _reference_bn_train(x2, g2, b2, eps=1e-5)
    assert jnp.allclose(out2, ref2, atol=1e-4, rtol=1e-4)

    print("KERNEL_OK")
</pallas_src>

<mosaic_0001>
module attributes {stable_mosaic.version = 11 : i64} {
  func.func @_bn_train_kernel(%arg0: i32, %arg1: memref<2x4x256xf32, #tpu.memory_space<vmem>>, %arg2: memref<1x4x1xf32, #tpu.memory_space<vmem>>, %arg3: memref<1x4x1xf32, #tpu.memory_space<vmem>>, %arg4: memref<2x4x256xf32, #tpu.memory_space<vmem>>) attributes {dimension_semantics = [#tpu.dimension_semantics<parallel>], iteration_bounds = array<i64: 1>, scalar_prefetch = 0 : i64, scratch_operands = 0 : i64, tpu.core_type = #tpu.core_type<tc>, window_params = [{transform_indices = @transform_0, window_bounds = array<i64: 2, 4, 256>}, {transform_indices = @transform_1, window_bounds = array<i64: 1, 4, 1>}, {transform_indices = @transform_2, window_bounds = array<i64: 1, 4, 1>}, {transform_indices = @transform_3, window_bounds = array<i64: 2, 4, 256>}]} {
    %c0 = arith.constant 0 : index
    %c0_0 = arith.constant 0 : index
    %c0_1 = arith.constant 0 : index
    %0 = vector.load %arg1[%c0, %c0_0, %c0_1] : memref<2x4x256xf32, #tpu.memory_space<vmem>>, vector<2x4x256xf32>
    %cst = arith.constant dense<0.000000e+00> : vector<4xf32>
    %1 = vector.multi_reduction <add>, %0, %cst [0, 2] : vector<2x4x256xf32> to vector<4xf32>
    %2 = vector.shape_cast %1 : vector<4xf32> to vector<1x4x1xf32>
    %3 = arith.mulf %0, %0 : vector<2x4x256xf32>
    %cst_2 = arith.constant dense<0.000000e+00> : vector<4xf32>
    %4 = vector.multi_reduction <add>, %3, %cst_2 [0, 2] : vector<2x4x256xf32> to vector<4xf32>
    %5 = vector.shape_cast %4 : vector<4xf32> to vector<1x4x1xf32>
    %cst_3 = arith.constant 0.001953125 : f32
    %6 = vector.broadcast %cst_3 : f32 to vector<1x4x1xf32>
    %7 = arith.mulf %2, %6 : vector<1x4x1xf32>
    %cst_4 = arith.constant 0.001953125 : f32
    %8 = vector.broadcast %cst_4 : f32 to vector<1x4x1xf32>
    %9 = arith.mulf %5, %8 : vector<1x4x1xf32>
    %10 = arith.mulf %7, %7 : vector<1x4x1xf32>
    %11 = arith.subf %9, %10 : vector<1x4x1xf32>
    %cst_5 = arith.constant 9.99999974E-6 : f32
    %12 = vector.broadcast %cst_5 : f32 to vector<1x4x1xf32>
    %13 = arith.addf %11, %12 : vector<1x4x1xf32>
    %14 = math.rsqrt %13 : vector<1x4x1xf32>
    %c0_6 = arith.constant 0 : index
    %c0_7 = arith.constant 0 : index
    %c0_8 = arith.constant 0 : index
    %15 = vector.load %arg2[%c0_6, %c0_7, %c0_8] : memref<1x4x1xf32, #tpu.memory_space<vmem>>, vector<1x4x1xf32>
    %c0_9 = arith.constant 0 : index
    %c0_10 = arith.constant 0 : index
    %c0_11 = arith.constant 0 : index
    %16 = vector.load %arg3[%c0_9, %c0_10, %c0_11] : memref<1x4x1xf32, #tpu.memory_space<vmem>>, vector<1x4x1xf32>
    %17 = arith.mulf %14, %15 : vector<1x4x1xf32>
    %18 = arith.mulf %7, %17 : vector<1x4x1xf32>
    %19 = arith.subf %16, %18 : vector<1x4x1xf32>
    %20 = vector.broadcast %17 : vector<1x4x1xf32> to vector<2x4x256xf32>
    %21 = arith.mulf %0, %20 : vector<2x4x256xf32>
    %22 = vector.broadcast %19 : vector<1x4x1xf32> to vector<2x4x256xf32>
    %23 = arith.addf %21, %22 : vector<2x4x256xf32>
    %c0_12 = arith.constant 0 : index
    %c0_13 = arith.constant 0 : index
    %c0_14 = arith.constant 0 : index
    %24 = vector.load %arg4[%c0_12, %c0_13, %c0_14] : memref<2x4x256xf32, #tpu.memory_space<vmem>>, vector<2x4x256xf32>
    tpu.vector_store %arg4[%c0_12, %c0_13, %c0_14], %23 {strides = array<i32>} : memref<2x4x256xf32, #tpu.memory_space<vmem>>, vector<2x4x256xf32>,
    return
  }
  func.func @transform_0(%arg0: i32) -> (i32, i32, i32) {
    %c0_i32 = arith.constant 0 : i32
    %c0_i32_0 = arith.constant 0 : i32
    %c0_i32_1 = arith.constant 0 : i32
    return %c0_i32, %arg0, %c0_i32_0 : i32, i32, i32
  }
  func.func @transform_1(%arg0: i32) -> (i32, i32, i32) {
    %c0_i32 = arith.constant 0 : i32
    %c0_i32_0 = arith.constant 0 : i32
    %c0_i32_1 = arith.constant 0 : i32
    return %c0_i32, %arg0, %c0_i32_0 : i32, i32, i32
  }
  func.func @transform_2(%arg0: i32) -> (i32, i32, i32) {
    %c0_i32 = arith.constant 0 : i32
    %c0_i32_0 = arith.constant 0 : i32
    %c0_i32_1 = arith.constant 0 : i32
    return %c0_i32, %arg0, %c0_i32_0 : i32, i32, i32
  }
  func.func @transform_3(%arg0: i32) -> (i32, i32, i32) {
    %c0_i32 = arith.constant 0 : i32
    %c0_i32_0 = arith.constant 0 : i32
    %c0_i32_1 = arith.constant 0 : i32
    return %c0_i32, %arg0, %c0_i32_0 : i32, i32, i32
  }
}

</mosaic_0001>

<llo_original>
// kernel: tpu_custom_call.1
$region0: #{tpu_custom_call.1}
  #allocation0 [shape = 'u32[]', space=smem, size = 0x4, offset = 0x4, fixed_abs, tag = 'smem constant byte address 0x4 - core index']
  #allocation1 [shape = 'u32[144,128]{1,0:T(1,128)}', space=vmem, size = 0x12000, scoped, tag = 'internal scratch']
  %s0 = inlined_call_operand.hbm [shape: f32[2,4,256], index: 0, kind: input, shape index: {}]
  %s1 = inlined_call_operand.vmem [shape: f32[1,4,1], index: 1, kind: input, shape index: {}]
  %s2 = inlined_call_operand.vmem [shape: f32[1,4,1], index: 2, kind: input, shape index: {}]
  %s3 = inlined_call_operand.hbm [shape: f32[2,4,256], index: 3, kind: output, shape index: {}]
  %s4 = sld [smem:[#allocation0]]
  $region26: #{tpu_custom_call.1} parent=0
    _
  %s6 = ssub.s32 1, %s4
  %s7 = scalar_select 0, %s6, %s4
  $region1: #{tpu_custom_call.1} parent=0
    #allocation2 [shape = 'u8[8192]{0}', space=vmem, size = 0x2000, scoped, tag = 'input window, operand 0, single buffered']
    #allocation3 [shape = 's32[1]{0}', space=sflag, size = 0x4, scoped, tag = 'scoped memory for tpu_custom_call.1']
    #allocation4 [shape = 's32[1]{0}', space=sflag, size = 0x4, scoped, tag = 'scoped memory for tpu_custom_call.1']
    #allocation5 [shape = 'u8[8192]{0}', space=vmem, size = 0x2000, scoped, tag = 'output window, operand 0, single buffered']
    %8 = vsyncpa [#allocation3], 0
    %9 = vsyncpa [#allocation4], 0
    // Predicated region
    $region2: #{tpu_custom_call.1} parent=1 // pred_check
      _
    $region3: #{tpu_custom_call.1} parent=1 // pred_check_branch
      %11 = sbr.rel (0) target = $region5
    $region4: #{tpu_custom_call.1} parent=1 // pred_region
      %s13 = ssub.s32 256, 256
      %14 = vsyncadd [#allocation3], %s13
      %s15 = sshll.u32 [#allocation2], 4
      %s16 = int_to_ptr.vmem [resolvable:$true] %s15
      %21 = dma.hbm_to_vmem [thread:$0]  %s0, 256, %s16, [#allocation3], 128, 128, 8
    $region5: #{tpu_custom_call.1} parent=1 // pred_fallthru
      _
    // Predicated region
    $region6: #{tpu_custom_call.1} parent=1 // pred_check
      _
    $region7: #{tpu_custom_call.1} parent=1 // pred_check_branch
      %23 = sbr.rel (0) target = $region9
    $region8: #{tpu_custom_call.1} parent=1 // pred_region
      _
    $region9: #{tpu_custom_call.1} parent=1 // pred_fallthru
      _
    // Predicated region
    $region10: #{tpu_custom_call.1} parent=1 // pred_check
      _
    $region11: #{tpu_custom_call.1} parent=1 // pred_check_branch
      %25 = sbr.rel (0) target = $region13
    $region12: #{tpu_custom_call.1} parent=1 // pred_region
      _
    $region13: #{tpu_custom_call.1} parent=1 // pred_fallthru
      _
    // Predicated region
    $region14: #{tpu_custom_call.1} parent=1 // pred_check
      _
    $region15: #{tpu_custom_call.1} parent=1 // pred_check_branch
      %27 = sbr.rel (0) target = $region17
    $region16: #{tpu_custom_call.1} parent=1 // pred_region
      %28 = dma.done [#allocation3], 256
    $region17: #{tpu_custom_call.1} parent=1 // pred_fallthru
      _
    %v29 = vld [vmem:[#allocation2] sm:$0xff]
    %v30 = vld [vmem:[#allocation2 + $0x8] sm:$0xff]
    %v33 = vcombine.high %v29, %v29
    %v34 = vcombine.high %v30, %v30
    %vm37 = vcmask 1043456
    %v38 = vsel %vm37, %v29, 0.0
    %v39 = vsel %vm37, %v33, 0.0
    %v40 = vadd.f32 %v38, %v39
    %v41 = vsel %vm37, %v30, 0.0
    %v42 = vadd.f32 %v40, %v41
    %v43 = vsel %vm37, %v34, 0.0
    %v44 = vadd.f32 %v42, %v43
    %45 = vadd.xlane.f32.xlu0 %v44
    %v46 = vpop.xlane.xlu0 %45
    %v47 = vmul.f32 %v29, %v29
    %v48 = vmul.f32 %v30, %v30
    %v51 = vcombine.high %v47, %v47
    %v52 = vcombine.high %v48, %v48
    %v55 = vsel %vm37, %v47, 0.0
    %v56 = vsel %vm37, %v51, 0.0
    %v57 = vadd.f32 %v55, %v56
    %v58 = vsel %vm37, %v48, 0.0
    %v59 = vadd.f32 %v57, %v58
    %v60 = vsel %vm37, %v52, 0.0
    %v61 = vadd.f32 %v59, %v60
    %62 = vadd.xlane.f32.xlu0 %v61
    %v63 = vpop.xlane.xlu0 %62
    %v64 = vmul.f32 %v46, 0.001953125
    %v65 = vmul.f32 %v63, 0.001953125
    %v66 = vmul.f32 %v64, %v64
    %v67 = vsub.f32 %v65, %v66
    %v68 = vadd.f32 %v67, 1e-05
    %v69 = vrsqrt.pop %v68
    %v70 = vld [vmem:[%s1] sm:$0xf]
    %v71 = vld [vmem:[%s2] sm:$0xf]
    %v72 = vmul.f32 %v69, %v70
    %v73 = vmul.f32 %v64, %v72
    %v74 = vsub.f32 %v71, %v73
    %76 = vset.pattern.permute.xlu0 0
    %77 = vperm.xlu0 %76, %v72
    %v78 = vpop.permute.xlu0 %77
    %v80 = vunpack.c.l.s4 839922192
    %v81 = vunpack.c.0.s8 %v80
    %v82 = vlaneseq
    %v83 = vshrl.u32 %v82, 7
    %v84 = vsub.s32 %v81, %v83
    %v85 = vrot.slane %v78, %v84
    %v87 = vmul.f32 %v29, %v85
    %v88 = vmul.f32 %v30, %v85
    %90 = vset.pattern.permute.xlu0 0
    %91 = vperm.xlu0 %90, %v74
    %v92 = vpop.permute.xlu0 %91
    %v94 = vunpack.c.l.s4 839922192
    %v95 = vunpack.c.0.s8 %v94
    %v96 = vlaneseq
    %v97 = vshrl.u32 %v96, 7
    %v98 = vsub.s32 %v95, %v97
    %v99 = vrot.slane %v92, %v98
    %v101 = vadd.f32 %v87, %v99
    %v102 = vadd.f32 %v88, %v99
    %103 = vst [vmem:[#allocation5] sm:$0xff] %v101
    %104 = vst [vmem:[#allocation5 + $0x8] sm:$0xff] %v102
    // Predicated region
    $region18: #{tpu_custom_call.1} parent=1 // pred_check
      _
    $region19: #{tpu_custom_call.1} parent=1 // pred_check_branch
      %106 = sbr.rel (0) target = $region21
    $region20: #{tpu_custom_call.1} parent=1 // pred_region
      %s108 = ssub.s32 256, 256
      %109 = vsyncadd [#allocation4], %s108
      %s110 = sshll.u32 [#allocation5], 4
      %s111 = int_to_ptr.vmem [resolvable:$true] %s110
      %116 = dma.vmem_to_hbm [thread:$0]  %s111, 256, %s3, [#allocation4], 128, 128, 8
    $region21: #{tpu_custom_call.1} parent=1 // pred_fallthru
      _
    // Predicated region
    $region22: #{tpu_custom_call.1} parent=1 // pred_check
      _
    $region23: #{tpu_custom_call.1} parent=1 // pred_check_branch
      %118 = sbr.rel (0) target = $region25
    $region24: #{tpu_custom_call.1} parent=1 // pred_region
      %119 = dma.done [#allocation4], 256
    $region25: #{tpu_custom_call.1} parent=1 // pred_fallthru
      _
    %120 = vsyncpa [#allocation3], 1
    %121 = vsyncpa [#allocation4], 1

</llo_original>
